<compile_context>
chip_gen: v5e
topology: v5e:2x2
jax: 0.10.0
libtpu: 0.0.40
codegen_flags: <defaults>
</compile_context>

<pallas_src>
import jax
import jax.numpy as jnp
from jax.experimental import pallas as pl
from jax.experimental.pallas import tpu as pltpu


def _round_up(n, m):
    return ((n + m - 1) // m) * m


def net_kernel(x_ref, wconv_ref, densew_ref, denseb_ref, linw_ref, linb_ref, out_ref):
    """Processes one batch tile.

    x_ref      : (TB, C*S)  f32 VMEM  (flat NCL layout: batch on sublanes, C*S on lanes)
    wconv_ref  : (C*S, Lp)  f32 VMEM  (resident Toeplitz conv weights, Lp = 128-padded L)
    densew_ref : (1, Lp)    f32 VMEM  (resident lane-dense dense-layer weight row)
    denseb_ref / linw_ref / linb_ref : (1, 1) f32 SMEM
    out_ref    : (TB, 1)    f32 VMEM
    """
    # --- Conv1d(C -> 1, kernel K, no bias) as a single MXU matmul against the
    #     Toeplitz weight slab (padded output lanes are exact zeros). ---
    y = jnp.dot(x_ref[...], wconv_ref[...],
                preferred_element_type=jnp.float32,
                precision=jax.lax.Precision.HIGHEST)          # (TB, Lp)

    # --- ReLU ---
    h = jnp.maximum(y, 0.0)

    # --- dense Linear(L, 1): VPU mul + XLU lane reduce (padded lanes contribute 0) ---
    d = jnp.sum(h * densew_ref[...], axis=-1, keepdims=True) + denseb_ref[0, 0]  # (TB, 1)

    # --- numerically-stable sigmoid: exp on EUP, exact reciprocal for 1e-5 parity ---
    e = jnp.exp(-jnp.abs(d))
    s = jnp.where(d >= 0.0, jnp.ones_like(e), e) * pl.reciprocal(1.0 + e, approx=False)

    # --- Net.linear: Linear(1, 1) on the single hidden column ---
    out_ref[...] = (s * linw_ref[0, 0] + linb_ref[0, 0]).astype(out_ref.dtype)


def net_forward(x, conv_w, dense_w, dense_b, lin_w, lin_b, *, batch_tile=4096):
    """x: (B, 4, S) float32 (PyTorch NCL layout). Returns (B, 1) float32."""
    B, C, S = x.shape
    K = conv_w.shape[1]
    L = S - K + 1
    Lp = _round_up(L, 128)
    CS = C * S

    # Flat (B, C*S) view of x — metadata-only reshape of the contiguous NCL tensor.
    x_flat = jnp.reshape(x, (B, CS))

    # Toeplitz conv weight: Wconv[c*S + j + k, j] = conv_w[c, k]; zero elsewhere.
    j = jnp.arange(L)
    wconv = jnp.zeros((C, S, Lp), jnp.float32)
    for c in range(C):
        for k in range(K):
            wconv = wconv.at[c, j + k, j].set(conv_w[c, k])
    wconv = wconv.reshape(CS, Lp)

    # Lane-dense, zero-padded dense weight row.
    dense_row = jnp.zeros((1, Lp), jnp.float32).at[0, :L].set(jnp.reshape(dense_w, (L,)))

    # Batch tile: multiple of 8 sublanes; clamp so dual-TensorCore chips (v7x) get at
    # least 2 grid steps to shard across when the batch allows it.
    TB = min(_round_up(batch_tile, 8), _round_up(B, 8))
    if B > 8:
        TB = min(TB, _round_up(pl.cdiv(B, 2), 8))
    TB = max(TB, 8)

    B_pad = _round_up(B, TB)
    x_in = x_flat if B_pad == B else jnp.pad(x_flat, ((0, B_pad - B), (0, 0)))
    grid = (B_pad // TB,)

    # VMEM budget: double-buffered x/out tiles + resident weight slabs, with headroom;
    # keep the cap comfortably below v7x's 64 MiB physical VMEM.
    lane = 128
    x_tile_bytes = TB * _round_up(CS, lane) * 4
    out_tile_bytes = TB * lane * 4
    w_bytes = _round_up(CS, 8) * Lp * 4 + 8 * Lp * 4
    vmem_needed = 2 * (x_tile_bytes + out_tile_bytes) + 2 * w_bytes + (2 << 20)
    vmem_limit = int(min(max(32 << 20, vmem_needed), 56 << 20))

    out = pl.pallas_call(
        net_kernel,
        out_shape=jax.ShapeDtypeStruct((B_pad, 1), jnp.float32),
        grid=grid,
        in_specs=[
            pl.BlockSpec((TB, CS), lambda i: (i, 0)),             # x tile (double-buffered)
            pl.BlockSpec((CS, Lp), lambda i: (0, 0)),             # Toeplitz conv W (resident)
            pl.BlockSpec((1, Lp), lambda i: (0, 0)),              # dense row (resident)
            pl.BlockSpec(memory_space=pltpu.MemorySpace.SMEM),    # dense_b (1, 1)
            pl.BlockSpec(memory_space=pltpu.MemorySpace.SMEM),    # lin_w  (1, 1)
            pl.BlockSpec(memory_space=pltpu.MemorySpace.SMEM),    # lin_b  (1, 1)
        ],
        out_specs=pl.BlockSpec((TB, 1), lambda i: (i, 0)),
        compiler_params=pltpu.CompilerParams(
            dimension_semantics=("parallel",),
            vmem_limit_bytes=vmem_limit,
        ),
    )(x_in, wconv, dense_row, dense_b, lin_w, lin_b)
    return out[:B]


def net_reference(x, conv_w, dense_w, dense_b, lin_w, lin_b):
    """Pure-JAX (VPU-exact) reference of the same forward pass."""
    B, C, S = x.shape
    K = conv_w.shape[1]
    L = S - K + 1
    y = jnp.zeros((B, L), jnp.float32)
    for c in range(C):
        for k in range(K):
            y = y + conv_w[c, k] * x[:, c, k:k + L]
    h = jnp.maximum(y, 0.0)
    d = jnp.sum(h * jnp.reshape(dense_w, (1, L)), axis=-1, keepdims=True) + dense_b[0, 0]
    s = jax.nn.sigmoid(d)
    return s * lin_w[0, 0] + lin_b[0, 0]


if __name__ == "__main__":
    # Shapes consistent with the module: channels=4 (fixed by Conv1d),
    # sequence length = module default size = 101, filter_size = 2.
    C, S, K = 4, 101, 2
    L = S - K + 1

    key = jax.random.PRNGKey(0)
    kx, kcw, kdw, kdb, klw, klb, kx2, kx3 = jax.random.split(key, 8)

    # Deterministic, PyTorch-style uniform init bounds.
    conv_bound = 1.0 / jnp.sqrt(jnp.float32(C * K))
    conv_w = jax.random.uniform(kcw, (C, K), jnp.float32, -conv_bound, conv_bound)

    dense_bound = 1.0 / jnp.sqrt(jnp.float32(L))
    dense_w = jax.random.uniform(kdw, (L, 1), jnp.float32, -dense_bound, dense_bound)
    dense_b = jax.random.uniform(kdb, (1, 1), jnp.float32, -dense_bound, dense_bound)

    lin_w = jax.random.uniform(klw, (1, 1), jnp.float32, -1.0, 1.0)
    lin_b = jax.random.uniform(klb, (1, 1), jnp.float32, -1.0, 1.0)

    # --- Test 1: tiny batch (B=2), single grid step. ---
    B1 = 2
    x1 = jax.random.normal(kx, (B1, C, S), dtype=jnp.float32)
    out1 = jax.block_until_ready(net_forward(x1, conv_w, dense_w, dense_b, lin_w, lin_b))
    ref1 = net_reference(x1, conv_w, dense_w, dense_b, lin_w, lin_b)
    assert out1.shape == (B1, 1), out1.shape
    assert jnp.allclose(out1, ref1, atol=1e-5, rtol=1e-5), (out1, ref1)

    # --- Test 2: non-divisible batch with a small tile -> multi-step pipelined grid. ---
    B2 = 37
    x2 = jax.random.normal(kx2, (B2, C, S), dtype=jnp.float32)
    out2 = jax.block_until_ready(
        net_forward(x2, conv_w, dense_w, dense_b, lin_w, lin_b, batch_tile=16))
    ref2 = net_reference(x2, conv_w, dense_w, dense_b, lin_w, lin_b)
    assert out2.shape == (B2, 1), out2.shape
    assert jnp.allclose(out2, ref2, atol=1e-5, rtol=1e-5), (out2, ref2)

    # --- Test 3: default tile with B=40 -> exercises the >=2-grid-step clamp path. ---
    B3 = 40
    x3 = jax.random.normal(kx3, (B3, C, S), dtype=jnp.float32)
    out3 = jax.block_until_ready(net_forward(x3, conv_w, dense_w, dense_b, lin_w, lin_b))
    ref3 = net_reference(x3, conv_w, dense_w, dense_b, lin_w, lin_b)
    assert out3.shape == (B3, 1), out3.shape
    assert jnp.allclose(out3, ref3, atol=1e-5, rtol=1e-5), (out3, ref3)

    print("KERNEL_OK")
</pallas_src>

<mosaic_0001>
module attributes {stable_mosaic.version = 11 : i64} {
  func.func @net_kernel(%arg0: i32, %arg1: memref<8x404xf32, #tpu.memory_space<vmem>>, %arg2: memref<404x128xf32, #tpu.memory_space<vmem>>, %arg3: memref<1x128xf32, #tpu.memory_space<vmem>>, %arg4: memref<1x1xf32, #tpu.memory_space<smem>>, %arg5: memref<1x1xf32, #tpu.memory_space<smem>>, %arg6: memref<1x1xf32, #tpu.memory_space<smem>>, %arg7: memref<8x1xf32, #tpu.memory_space<vmem>>) attributes {dimension_semantics = [#tpu.dimension_semantics<parallel>], iteration_bounds = array<i64: 1>, scalar_prefetch = 0 : i64, scratch_operands = 0 : i64, tpu.core_type = #tpu.core_type<tc>, window_params = [{transform_indices = @transform_0, window_bounds = array<i64: 8, 404>}, {pipeline_mode = #tpu.pipeline_mode<synchronous>, transform_indices = @transform_1, window_bounds = array<i64: 404, 128>}, {pipeline_mode = #tpu.pipeline_mode<synchronous>, transform_indices = @transform_2, window_bounds = array<i64: 1, 128>}, {transform_indices = @transform_3, window_bounds = array<i64: 1, 1>}, {transform_indices = @transform_4, window_bounds = array<i64: 1, 1>}, {transform_indices = @transform_5, window_bounds = array<i64: 1, 1>}, {transform_indices = @transform_6, window_bounds = array<i64: 8, 1>}]} {
    %c0 = arith.constant 0 : index
    %c0_0 = arith.constant 0 : index
    %0 = vector.load %arg1[%c0, %c0_0] : memref<8x404xf32, #tpu.memory_space<vmem>>, vector<8x404xf32>
    %c0_1 = arith.constant 0 : index
    %c0_2 = arith.constant 0 : index
    %1 = vector.load %arg2[%c0_1, %c0_2] : memref<404x128xf32, #tpu.memory_space<vmem>>, vector<404x128xf32>
    %cst = arith.constant dense<0.000000e+00> : vector<8x128xf32>
    %2 = tpu.matmul %0, %1, %cst {dimension_numbers = #tpu.dot_dimension_numbers<[1], [0], [0], [1], [0, 0, 1, 1], [], []>, precision = #tpu.contract_precision<fp32>} : vector<8x404xf32>, vector<404x128xf32>, vector<8x128xf32> -> vector<8x128xf32>
    %cst_3 = arith.constant 0.000000e+00 : f32
    %3 = vector.broadcast %cst_3 : f32 to vector<8x128xf32>
    %4 = arith.maximumf %2, %3 : vector<8x128xf32>
    %c0_4 = arith.constant 0 : index
    %c0_5 = arith.constant 0 : index
    %5 = vector.load %arg3[%c0_4, %c0_5] : memref<1x128xf32, #tpu.memory_space<vmem>>, vector<1x128xf32>
    %6 = vector.broadcast %5 : vector<1x128xf32> to vector<8x128xf32>
    %7 = arith.mulf %4, %6 : vector<8x128xf32>
    %cst_6 = arith.constant dense<0.000000e+00> : vector<8xf32>
    %8 = vector.multi_reduction <add>, %7, %cst_6 [1] : vector<8x128xf32> to vector<8xf32>
    %9 = vector.shape_cast %8 : vector<8xf32> to vector<8x1xf32>
    %c0_7 = arith.constant 0 : index
    %c0_8 = arith.constant 0 : index
    %10 = memref.load %arg4[%c0_7, %c0_8] : memref<1x1xf32, #tpu.memory_space<smem>>
    %11 = vector.broadcast %10 : f32 to vector<8x1xf32>
    %12 = arith.addf %9, %11 : vector<8x1xf32>
    %13 = math.absf %12 : vector<8x1xf32>
    %cst_9 = arith.constant 0.000000e+00 : f32
    %14 = vector.broadcast %cst_9 : f32 to vector<8x1xf32>
    %15 = arith.subf %14, %13 : vector<8x1xf32>
    %16 = math.exp %15 : vector<8x1xf32>
    %cst_10 = arith.constant 0.000000e+00 : f32
    %17 = vector.broadcast %cst_10 : f32 to vector<8x1xf32>
    %18 = arith.cmpf oge, %12, %17 : vector<8x1xf32>
    %cst_11 = arith.constant 1.000000e+00 : f32
    %19 = vector.broadcast %cst_11 : f32 to vector<8x1xf32>
    %20 = arith.select %18, %19, %16 : vector<8x1xi1>, vector<8x1xf32>
    %cst_12 = arith.constant 1.000000e+00 : f32
    %21 = vector.broadcast %cst_12 : f32 to vector<8x1xf32>
    %22 = arith.addf %21, %16 : vector<8x1xf32>
    %23 = tpu.reciprocal %22 : vector<8x1xf32> -> vector<8x1xf32>
    %24 = arith.mulf %20, %23 : vector<8x1xf32>
    %c0_13 = arith.constant 0 : index
    %c0_14 = arith.constant 0 : index
    %25 = memref.load %arg5[%c0_13, %c0_14] : memref<1x1xf32, #tpu.memory_space<smem>>
    %26 = vector.broadcast %25 : f32 to vector<8x1xf32>
    %27 = arith.mulf %24, %26 : vector<8x1xf32>
    %c0_15 = arith.constant 0 : index
    %c0_16 = arith.constant 0 : index
    %28 = memref.load %arg6[%c0_15, %c0_16] : memref<1x1xf32, #tpu.memory_space<smem>>
    %29 = vector.broadcast %28 : f32 to vector<8x1xf32>
    %30 = arith.addf %27, %29 : vector<8x1xf32>
    %c0_17 = arith.constant 0 : index
    %c0_18 = arith.constant 0 : index
    %31 = vector.load %arg7[%c0_17, %c0_18] : memref<8x1xf32, #tpu.memory_space<vmem>>, vector<8x1xf32>
    tpu.vector_store %arg7[%c0_17, %c0_18], %30 {strides = array<i32>} : memref<8x1xf32, #tpu.memory_space<vmem>>, vector<8x1xf32>,
    return
  }
  func.func @transform_0(%arg0: i32) -> (i32, i32) {
    %c0_i32 = arith.constant 0 : i32
    %c0_i32_0 = arith.constant 0 : i32
    return %arg0, %c0_i32 : i32, i32
  }
  func.func @transform_1(%arg0: i32) -> (i32, i32) {
    %c0_i32 = arith.constant 0 : i32
    %c0_i32_0 = arith.constant 0 : i32
    %c0_i32_1 = arith.constant 0 : i32
    return %c0_i32, %c0_i32_0 : i32, i32
  }
  func.func @transform_2(%arg0: i32) -> (i32, i32) {
    %c0_i32 = arith.constant 0 : i32
    %c0_i32_0 = arith.constant 0 : i32
    %c0_i32_1 = arith.constant 0 : i32
    return %c0_i32, %c0_i32_0 : i32, i32
  }
  func.func @transform_3(%arg0: i32) -> (i32, i32) {
    %c0_i32 = arith.constant 0 : i32
    %c0_i32_0 = arith.constant 0 : i32
    %c0_i32_1 = arith.constant 0 : i32
    return %c0_i32, %c0_i32_0 : i32, i32
  }
  func.func @transform_4(%arg0: i32) -> (i32, i32) {
    %c0_i32 = arith.constant 0 : i32
    %c0_i32_0 = arith.constant 0 : i32
    %c0_i32_1 = arith.constant 0 : i32
    return %c0_i32, %c0_i32_0 : i32, i32
  }
  func.func @transform_5(%arg0: i32) -> (i32, i32) {
    %c0_i32 = arith.constant 0 : i32
    %c0_i32_0 = arith.constant 0 : i32
    %c0_i32_1 = arith.constant 0 : i32
    return %c0_i32, %c0_i32_0 : i32, i32
  }
  func.func @transform_6(%arg0: i32) -> (i32, i32) {
    %c0_i32 = arith.constant 0 : i32
    %c0_i32_0 = arith.constant 0 : i32
    return %arg0, %c0_i32 : i32, i32
  }
}

</mosaic_0001>

<llo_original>
// kernel: tpu_custom_call.1
$region0: #{tpu_custom_call.1}
  #allocation0 [shape = 'u32[]', space=smem, size = 0x4, offset = 0x4, fixed_abs, tag = 'smem constant byte address 0x4 - core index']
  #allocation1 [shape = 'u32[72,128]{1,0:T(1,128)}', space=vmem, size = 0x9000, scoped, tag = 'internal scratch']
  #allocation2 [shape = 'f32[1,1]{1,0:T(1,128)S(6)}', space=smem, size = 0x200, scoped, tag = 'scoped memory for tpu_custom_call.1']
  #allocation3 [shape = 'f32[1,1]{1,0:T(1,128)S(6)}', space=smem, size = 0x200, scoped, tag = 'scoped memory for tpu_custom_call.1']
  #allocation4 [shape = 'f32[1,1]{1,0:T(1,128)S(6)}', space=smem, size = 0x200, scoped, tag = 'scoped memory for tpu_custom_call.1']
  %s0 = inlined_call_operand.hbm [shape: f32[8,404], index: 0, kind: input, shape index: {}]
  %s1 = inlined_call_operand.hbm [shape: f32[404,128], index: 1, kind: input, shape index: {}]
  %s2 = inlined_call_operand.vmem [shape: f32[1,128], index: 2, kind: input, shape index: {}]
  %s3 = inlined_call_operand.<no memory space> [shape: f32[1,1], index: 3, kind: input, shape index: {}]
  %s4 = inlined_call_operand.<no memory space> [shape: f32[1,1], index: 4, kind: input, shape index: {}]
  %s5 = inlined_call_operand.<no memory space> [shape: f32[1,1], index: 5, kind: input, shape index: {}]
  %s6 = inlined_call_operand.vmem [shape: f32[8,1], index: 6, kind: output, shape index: {}]
  %s7 = sld [smem:[#allocation0]]
  $region42: #{tpu_custom_call.1} parent=0
    _
  %s9 = ssub.s32 1, %s7
  %s10 = scalar_select 0, %s9, %s7
  %11 = sst [smem:[#allocation2]] %s3
  %12 = sst [smem:[#allocation3]] %s4
  %13 = sst [smem:[#allocation4]] %s5
  $region1: #{tpu_custom_call.1} parent=0
    #allocation5 [shape = 'u8[16384]{0}', space=vmem, size = 0x4000, scoped, tag = 'input window, operand 0, single buffered']
    #allocation6 [shape = 's32[1]{0}', space=sflag, size = 0x4, scoped, tag = 'scoped memory for tpu_custom_call.1']
    #allocation7 [shape = 'u8[208896]{0}', space=vmem, size = 0x33000, scoped, tag = 'input window, operand 1, single buffered']
    #allocation8 [shape = 's32[1]{0}', space=sflag, size = 0x4, scoped, tag = 'scoped memory for tpu_custom_call.1']
    %14 = vsyncpa [#allocation6], 0
    %15 = vsyncpa [#allocation8], 0
    // Predicated region
    $region2: #{tpu_custom_call.1} parent=1 // pred_check
      _
    $region3: #{tpu_custom_call.1} parent=1 // pred_check_branch
      %17 = sbr.rel (0) target = $region5
    $region4: #{tpu_custom_call.1} parent=1 // pred_region
      %19 = vsyncadd [#allocation6], 0
      %s21 = sshll.u32 %s0, 4
      %s22 = int_to_ptr.hbm [resolvable:$true] %s21
      %s23 = sshll.u32 [#allocation5], 4
      %s24 = int_to_ptr.vmem [resolvable:$true] %s23
      %26 = dma.hbm_to_vmem [thread:$0]  %s22, 512, %s24, [#allocation6]
    $region5: #{tpu_custom_call.1} parent=1 // pred_fallthru
      _
    // Predicated region
    $region6: #{tpu_custom_call.1} parent=1 // pred_check
      _
    $region7: #{tpu_custom_call.1} parent=1 // pred_check_branch
      %28 = sbr.rel (0) target = $region9
    $region8: #{tpu_custom_call.1} parent=1 // pred_region
      %30 = vsyncadd [#allocation8], 0
      %s31 = sshll.u32 %s1, 4
      %s32 = int_to_ptr.hbm [resolvable:$true] %s31
      %s33 = sshll.u32 [#allocation7], 4
      %s34 = int_to_ptr.vmem [resolvable:$true] %s33
      %39 = dma.hbm_to_vmem [thread:$0]  %s32, 6528, %s34, [#allocation8], 128, 128, 8
    $region9: #{tpu_custom_call.1} parent=1 // pred_fallthru
      _
    // Predicated region
    $region10: #{tpu_custom_call.1} parent=1 // pred_check
      _
    $region11: #{tpu_custom_call.1} parent=1 // pred_check_branch
      %41 = sbr.rel (0) target = $region13
    $region12: #{tpu_custom_call.1} parent=1 // pred_region
      _
    $region13: #{tpu_custom_call.1} parent=1 // pred_fallthru
      _
    // Predicated region
    $region14: #{tpu_custom_call.1} parent=1 // pred_check
      _
    $region15: #{tpu_custom_call.1} parent=1 // pred_check_branch
      %43 = sbr.rel (0) target = $region17
    $region16: #{tpu_custom_call.1} parent=1 // pred_region
      _
    $region17: #{tpu_custom_call.1} parent=1 // pred_fallthru
      _
    // Predicated region
    $region18: #{tpu_custom_call.1} parent=1 // pred_check
      _
    $region19: #{tpu_custom_call.1} parent=1 // pred_check_branch
      %45 = sbr.rel (0) target = $region21
    $region20: #{tpu_custom_call.1} parent=1 // pred_region
      _
    $region21: #{tpu_custom_call.1} parent=1 // pred_fallthru
      _
    // Predicated region
    $region22: #{tpu_custom_call.1} parent=1 // pred_check
      _
    $region23: #{tpu_custom_call.1} parent=1 // pred_check_branch
      %47 = sbr.rel (0) target = $region25
    $region24: #{tpu_custom_call.1} parent=1 // pred_region
      _
    $region25: #{tpu_custom_call.1} parent=1 // pred_fallthru
      _
    // Predicated region
    $region26: #{tpu_custom_call.1} parent=1 // pred_check
      _
    $region27: #{tpu_custom_call.1} parent=1 // pred_check_branch
      %49 = sbr.rel (0) target = $region29
    $region28: #{tpu_custom_call.1} parent=1 // pred_region
      %51 = dma.done [#allocation6], 512
    $region29: #{tpu_custom_call.1} parent=1 // pred_fallthru
      _
    // Predicated region
    $region30: #{tpu_custom_call.1} parent=1 // pred_check
      _
    $region31: #{tpu_custom_call.1} parent=1 // pred_check_branch
      %53 = sbr.rel (0) target = $region33
    $region32: #{tpu_custom_call.1} parent=1 // pred_region
      %55 = dma.done [#allocation8], 6528
    $region33: #{tpu_custom_call.1} parent=1 // pred_fallthru
      _
    %v56 = vld [vmem:[#allocation5] sm:$0xff]
    %v57 = vld [vmem:[#allocation5 + $0x8] sm:$0xff]
    %v58 = vld [vmem:[#allocation5 + $0x10] sm:$0xff]
    %v59 = vld [vmem:[#allocation5 + $0x18] sm:$0xff]
    %v60 = vld [vmem:[#allocation7] sm:$0xff]
    %v61 = vld [vmem:[#allocation7 + $0x8] sm:$0xff]
    %v62 = vld [vmem:[#allocation7 + $0x10] sm:$0xff]
    %v63 = vld [vmem:[#allocation7 + $0x18] sm:$0xff]
    %v64 = vld [vmem:[#allocation7 + $0x20] sm:$0xff]
    %v65 = vld [vmem:[#allocation7 + $0x28] sm:$0xff]
    %v66 = vld [vmem:[#allocation7 + $0x30] sm:$0xff]
    %v67 = vld [vmem:[#allocation7 + $0x38] sm:$0xff]
    %v68 = vld [vmem:[#allocation7 + $0x40] sm:$0xff]
    %v69 = vld [vmem:[#allocation7 + $0x48] sm:$0xff]
    %v70 = vld [vmem:[#allocation7 + $0x50] sm:$0xff]
    %v71 = vld [vmem:[#allocation7 + $0x58] sm:$0xff]
    %v72 = vld [vmem:[#allocation7 + $0x60] sm:$0xff]
    %v73 = vld [vmem:[#allocation7 + $0x68] sm:$0xff]
    %v74 = vld [vmem:[#allocation7 + $0x70] sm:$0xff]
    %v75 = vld [vmem:[#allocation7 + $0x78] sm:$0xff]
    %v76 = vld [vmem:[#allocation7 + $0x80] sm:$0xff]
    %v77 = vld [vmem:[#allocation7 + $0x88] sm:$0xff]
    %v78 = vld [vmem:[#allocation7 + $0x90] sm:$0xff]
    %v79 = vld [vmem:[#allocation7 + $0x98] sm:$0xff]
    %v80 = vld [vmem:[#allocation7 + $0xa0] sm:$0xff]
    %v81 = vld [vmem:[#allocation7 + $0xa8] sm:$0xff]
    %v82 = vld [vmem:[#allocation7 + $0xb0] sm:$0xff]
    %v83 = vld [vmem:[#allocation7 + $0xb8] sm:$0xff]
    %v84 = vld [vmem:[#allocation7 + $0xc0] sm:$0xff]
    %v85 = vld [vmem:[#allocation7 + $0xc8] sm:$0xff]
    %v86 = vld [vmem:[#allocation7 + $0xd0] sm:$0xff]
    %v87 = vld [vmem:[#allocation7 + $0xd8] sm:$0xff]
    %v88 = vld [vmem:[#allocation7 + $0xe0] sm:$0xff]
    %v89 = vld [vmem:[#allocation7 + $0xe8] sm:$0xff]
    %v90 = vld [vmem:[#allocation7 + $0xf0] sm:$0xff]
    %v91 = vld [vmem:[#allocation7 + $0xf8] sm:$0xff]
    %v92 = vld [vmem:[#allocation7 + $0x100] sm:$0xff]
    %v93 = vld [vmem:[#allocation7 + $0x108] sm:$0xff]
    %v94 = vld [vmem:[#allocation7 + $0x110] sm:$0xff]
    %v95 = vld [vmem:[#allocation7 + $0x118] sm:$0xff]
    %v96 = vld [vmem:[#allocation7 + $0x120] sm:$0xff]
    %v97 = vld [vmem:[#allocation7 + $0x128] sm:$0xff]
    %v98 = vld [vmem:[#allocation7 + $0x130] sm:$0xff]
    %v99 = vld [vmem:[#allocation7 + $0x138] sm:$0xff]
    %v100 = vld [vmem:[#allocation7 + $0x140] sm:$0xff]
    %v101 = vld [vmem:[#allocation7 + $0x148] sm:$0xff]
    %v102 = vld [vmem:[#allocation7 + $0x150] sm:$0xff]
    %v103 = vld [vmem:[#allocation7 + $0x158] sm:$0xff]
    %v104 = vld [vmem:[#allocation7 + $0x160] sm:$0xff]
    %v105 = vld [vmem:[#allocation7 + $0x168] sm:$0xff]
    %v106 = vld [vmem:[#allocation7 + $0x170] sm:$0xff]
    %v107 = vld [vmem:[#allocation7 + $0x178] sm:$0xff]
    %v108 = vld [vmem:[#allocation7 + $0x180] sm:$0xff]
    %v109 = vld [vmem:[#allocation7 + $0x188] sm:$0xff]
    %v110 = vld [vmem:[#allocation7 + $0x190] sm:$0xf]
    %vm111 = vcmask 162816
    %v113 = vsel %vm111, %v59, 0
    %vm115 = vcmask 1043456
    %v117 = vsel %vm115, %v110, 0
    %v119 = vand.u32 %v75, 4294901760
    %120 = vmatpush.msra.mxu0 %v119
    %v121 = vand.u32 %v74, 4294901760
    %122 = vmatpush.msra.mxu0 %v121
    %v123 = vand.u32 %v73, 4294901760
    %124 = vmatpush.msra.mxu0 %v123
    %v125 = vand.u32 %v72, 4294901760
    %126 = vmatpush.msra.mxu0 %v125
    %v127 = vand.u32 %v71, 4294901760
    %128 = vmatpush.msra.mxu0 %v127
    %v129 = vand.u32 %v70, 4294901760
    %130 = vmatpush.msra.mxu0 %v129
    %v131 = vand.u32 %v69, 4294901760
    %132 = vmatpush.msra.mxu0 %v131
    %v133 = vand.u32 %v68, 4294901760
    %134 = vmatpush.msra.mxu0 %v133
    %v135 = vand.u32 %v67, 4294901760
    %136 = vmatpush.msra.mxu0 %v135
    %v137 = vand.u32 %v66, 4294901760
    %138 = vmatpush.msra.mxu0 %v137
    %v139 = vand.u32 %v65, 4294901760
    %140 = vmatpush.msra.mxu0 %v139
    %v141 = vand.u32 %v64, 4294901760
    %142 = vmatpush.msra.mxu0 %v141
    %v143 = vand.u32 %v63, 4294901760
    %144 = vmatpush.msra.mxu0 %v143
    %v145 = vand.u32 %v62, 4294901760
    %146 = vmatpush.msra.mxu0 %v145
    %v147 = vand.u32 %v61, 4294901760
    %148 = vmatpush.msra.mxu0 %v147
    %v149 = vand.u32 %v60, 4294901760
    %150 = vmatpush.msra.mxu0 %v149
    %v151 = vand.u32 %v56, 4294901760
    %v152 = vsub.f32 %v56, %v151
    %v153 = vand.u32 %v152, 4294901760
    %v154 = vsub.f32 %v152, %v153
    %v155 = vand.u32 %v154, 4294901760
    %156 = vmatmul.f32.gmra.mxu0 %v155
    %v157 = vpop.f32.mrf.mxu0
    %v158 = vadd.f32 0.0, %v157
    %159 = vdwg.mxu0
    %v160 = vand.u32 %v75, 4294901760
    %v161 = vsub.f32 %v75, %v160
    %v162 = vand.u32 %v161, 4294901760
    %v163 = vsub.f32 %v161, %v162
    %v164 = vand.u32 %v163, 4294901760
    %165 = vmatpush.msra.mxu0 %v164
    %v166 = vand.u32 %v74, 4294901760
    %v167 = vsub.f32 %v74, %v166
    %v168 = vand.u32 %v167, 4294901760
    %v169 = vsub.f32 %v167, %v168
    %v170 = vand.u32 %v169, 4294901760
    %171 = vmatpush.msra.mxu0 %v170
    %v172 = vand.u32 %v73, 4294901760
    %v173 = vsub.f32 %v73, %v172
    %v174 = vand.u32 %v173, 4294901760
    %v175 = vsub.f32 %v173, %v174
    %v176 = vand.u32 %v175, 4294901760
    %177 = vmatpush.msra.mxu0 %v176
    %v178 = vand.u32 %v72, 4294901760
    %v179 = vsub.f32 %v72, %v178
    %v180 = vand.u32 %v179, 4294901760
    %v181 = vsub.f32 %v179, %v180
    %v182 = vand.u32 %v181, 4294901760
    %183 = vmatpush.msra.mxu0 %v182
    %v184 = vand.u32 %v71, 4294901760
    %v185 = vsub.f32 %v71, %v184
    %v186 = vand.u32 %v185, 4294901760
    %v187 = vsub.f32 %v185, %v186
    %v188 = vand.u32 %v187, 4294901760
    %189 = vmatpush.msra.mxu0 %v188
    %v190 = vand.u32 %v70, 4294901760
    %v191 = vsub.f32 %v70, %v190
    %v192 = vand.u32 %v191, 4294901760
    %v193 = vsub.f32 %v191, %v192
    %v194 = vand.u32 %v193, 4294901760
    %195 = vmatpush.msra.mxu0 %v194
    %v196 = vand.u32 %v69, 4294901760
    %v197 = vsub.f32 %v69, %v196
    %v198 = vand.u32 %v197, 4294901760
    %v199 = vsub.f32 %v197, %v198
    %v200 = vand.u32 %v199, 4294901760
    %201 = vmatpush.msra.mxu0 %v200
    %v202 = vand.u32 %v68, 4294901760
    %v203 = vsub.f32 %v68, %v202
    %v204 = vand.u32 %v203, 4294901760
    %v205 = vsub.f32 %v203, %v204
    %v206 = vand.u32 %v205, 4294901760
    %207 = vmatpush.msra.mxu0 %v206
    %v208 = vand.u32 %v67, 4294901760
    %v209 = vsub.f32 %v67, %v208
    %v210 = vand.u32 %v209, 4294901760
    %v211 = vsub.f32 %v209, %v210
    %v212 = vand.u32 %v211, 4294901760
    %213 = vmatpush.msra.mxu0 %v212
    %v214 = vand.u32 %v66, 4294901760
    %v215 = vsub.f32 %v66, %v214
    %v216 = vand.u32 %v215, 4294901760
    %v217 = vsub.f32 %v215, %v216
    %v218 = vand.u32 %v217, 4294901760
    %219 = vmatpush.msra.mxu0 %v218
    %v220 = vand.u32 %v65, 4294901760
    %v221 = vsub.f32 %v65, %v220
    %v222 = vand.u32 %v221, 4294901760
    %v223 = vsub.f32 %v221, %v222
    %v224 = vand.u32 %v223, 4294901760
    %225 = vmatpush.msra.mxu0 %v224
    %v226 = vand.u32 %v64, 4294901760
    %v227 = vsub.f32 %v64, %v226
    %v228 = vand.u32 %v227, 4294901760
    %v229 = vsub.f32 %v227, %v228
    %v230 = vand.u32 %v229, 4294901760
    %231 = vmatpush.msra.mxu0 %v230
    %v232 = vand.u32 %v63, 4294901760
    %v233 = vsub.f32 %v63, %v232
    %v234 = vand.u32 %v233, 4294901760
    %v235 = vsub.f32 %v233, %v234
    %v236 = vand.u32 %v235, 4294901760
    %237 = vmatpush.msra.mxu0 %v236
    %v238 = vand.u32 %v62, 4294901760
    %v239 = vsub.f32 %v62, %v238
    %v240 = vand.u32 %v239, 4294901760
    %v241 = vsub.f32 %v239, %v240
    %v242 = vand.u32 %v241, 4294901760
    %243 = vmatpush.msra.mxu0 %v242
    %v244 = vand.u32 %v61, 4294901760
    %v245 = vsub.f32 %v61, %v244
    %v246 = vand.u32 %v245, 4294901760
    %v247 = vsub.f32 %v245, %v246
    %v248 = vand.u32 %v247, 4294901760
    %249 = vmatpush.msra.mxu0 %v248
    %v250 = vand.u32 %v60, 4294901760
    %v251 = vsub.f32 %v60, %v250
    %v252 = vand.u32 %v251, 4294901760
    %v253 = vsub.f32 %v251, %v252
    %v254 = vand.u32 %v253, 4294901760
    %255 = vmatpush.msra.mxu0 %v254
    %v256 = vand.u32 %v56, 4294901760
    %257 = vmatmul.f32.gmra.mxu0 %v256
    %v258 = vpop.f32.mrf.mxu0
    %v259 = vadd.f32 %v158, %v258
    %260 = vdwg.mxu0
    %v261 = vand.u32 %v75, 4294901760
    %v262 = vsub.f32 %v75, %v261
    %263 = vmatpush.msra.mxu0 %v262
    %v264 = vand.u32 %v74, 4294901760
    %v265 = vsub.f32 %v74, %v264
    %266 = vmatpush.msra.mxu0 %v265
    %v267 = vand.u32 %v73, 4294901760
    %v268 = vsub.f32 %v73, %v267
    %269 = vmatpush.msra.mxu0 %v268
    %v270 = vand.u32 %v72, 4294901760
    %v271 = vsub.f32 %v72, %v270
    %272 = vmatpush.msra.mxu0 %v271
    %v273 = vand.u32 %v71, 4294901760
    %v274 = vsub.f32 %v71, %v273
    %275 = vmatpush.msra.mxu0 %v274
    %v276 = vand.u32 %v70, 4294901760
    %v277 = vsub.f32 %v70, %v276
    %278 = vmatpush.msra.mxu0 %v277
    %v279 = vand.u32 %v69, 4294901760
    %v280 = vsub.f32 %v69, %v279
    %281 = vmatpush.msra.mxu0 %v280
    %v282 = vand.u32 %v68, 4294901760
    %v283 = vsub.f32 %v68, %v282
    %284 = vmatpush.msra.mxu0 %v283
    %v285 = vand.u32 %v67, 4294901760
    %v286 = vsub.f32 %v67, %v285
    %287 = vmatpush.msra.mxu0 %v286
    %v288 = vand.u32 %v66, 4294901760
    %v289 = vsub.f32 %v66, %v288
    %290 = vmatpush.msra.mxu0 %v289
    %v291 = vand.u32 %v65, 4294901760
    %v292 = vsub.f32 %v65, %v291
    %293 = vmatpush.msra.mxu0 %v292
    %v294 = vand.u32 %v64, 4294901760
    %v295 = vsub.f32 %v64, %v294
    %296 = vmatpush.msra.mxu0 %v295
    %v297 = vand.u32 %v63, 4294901760
    %v298 = vsub.f32 %v63, %v297
    %299 = vmatpush.msra.mxu0 %v298
    %v300 = vand.u32 %v62, 4294901760
    %v301 = vsub.f32 %v62, %v300
    %302 = vmatpush.msra.mxu0 %v301
    %v303 = vand.u32 %v61, 4294901760
    %v304 = vsub.f32 %v61, %v303
    %305 = vmatpush.msra.mxu0 %v304
    %v306 = vand.u32 %v60, 4294901760
    %v307 = vsub.f32 %v60, %v306
    %308 = vmatpush.msra.mxu0 %v307
    %v309 = vand.u32 %v56, 4294901760
    %v310 = vsub.f32 %v56, %v309
    %311 = vmatmul.f32.gmra.mxu0 %v310
    %v312 = vpop.f32.mrf.mxu0
    %v313 = vadd.f32 %v259, %v312
    %314 = vdwg.mxu0
    %v315 = vand.u32 %v75, 4294901760
    %316 = vmatpush.msra.mxu0 %v315
    %v317 = vand.u32 %v74, 4294901760
    %318 = vmatpush.msra.mxu0 %v317
    %v319 = vand.u32 %v73, 4294901760
    %320 = vmatpush.msra.mxu0 %v319
    %v321 = vand.u32 %v72, 4294901760
    %322 = vmatpush.msra.mxu0 %v321
    %v323 = vand.u32 %v71, 4294901760
    %324 = vmatpush.msra.mxu0 %v323
    %v325 = vand.u32 %v70, 4294901760
    %326 = vmatpush.msra.mxu0 %v325
    %v327 = vand.u32 %v69, 4294901760
    %328 = vmatpush.msra.mxu0 %v327
    %v329 = vand.u32 %v68, 4294901760
    %330 = vmatpush.msra.mxu0 %v329
    %v331 = vand.u32 %v67, 4294901760
    %332 = vmatpush.msra.mxu0 %v331
    %v333 = vand.u32 %v66, 4294901760
    %334 = vmatpush.msra.mxu0 %v333
    %v335 = vand.u32 %v65, 4294901760
    %336 = vmatpush.msra.mxu0 %v335
    %v337 = vand.u32 %v64, 4294901760
    %338 = vmatpush.msra.mxu0 %v337
    %v339 = vand.u32 %v63, 4294901760
    %340 = vmatpush.msra.mxu0 %v339
    %v341 = vand.u32 %v62, 4294901760
    %342 = vmatpush.msra.mxu0 %v341
    %v343 = vand.u32 %v61, 4294901760
    %344 = vmatpush.msra.mxu0 %v343
    %v345 = vand.u32 %v60, 4294901760
    %346 = vmatpush.msra.mxu0 %v345
    %v347 = vand.u32 %v56, 4294901760
    %v348 = vsub.f32 %v56, %v347
    %v349 = vand.u32 %v348, 4294901760
    %350 = vmatmul.f32.gmra.mxu0 %v349
    %v351 = vpop.f32.mrf.mxu0
    %v352 = vadd.f32 %v313, %v351
    %353 = vdwg.mxu0
    %v354 = vand.u32 %v75, 4294901760
    %v355 = vsub.f32 %v75, %v354
    %v356 = vand.u32 %v355, 4294901760
    %357 = vmatpush.msra.mxu0 %v356
    %v358 = vand.u32 %v74, 4294901760
    %v359 = vsub.f32 %v74, %v358
    %v360 = vand.u32 %v359, 4294901760
    %361 = vmatpush.msra.mxu0 %v360
    %v362 = vand.u32 %v73, 4294901760
    %v363 = vsub.f32 %v73, %v362
    %v364 = vand.u32 %v363, 4294901760
    %365 = vmatpush.msra.mxu0 %v364
    %v366 = vand.u32 %v72, 4294901760
    %v367 = vsub.f32 %v72, %v366
    %v368 = vand.u32 %v367, 4294901760
    %369 = vmatpush.msra.mxu0 %v368
    %v370 = vand.u32 %v71, 4294901760
    %v371 = vsub.f32 %v71, %v370
    %v372 = vand.u32 %v371, 4294901760
    %373 = vmatpush.msra.mxu0 %v372
    %v374 = vand.u32 %v70, 4294901760
    %v375 = vsub.f32 %v70, %v374
    %v376 = vand.u32 %v375, 4294901760
    %377 = vmatpush.msra.mxu0 %v376
    %v378 = vand.u32 %v69, 4294901760
    %v379 = vsub.f32 %v69, %v378
    %v380 = vand.u32 %v379, 4294901760
    %381 = vmatpush.msra.mxu0 %v380
    %v382 = vand.u32 %v68, 4294901760
    %v383 = vsub.f32 %v68, %v382
    %v384 = vand.u32 %v383, 4294901760
    %385 = vmatpush.msra.mxu0 %v384
    %v386 = vand.u32 %v67, 4294901760
    %v387 = vsub.f32 %v67, %v386
    %v388 = vand.u32 %v387, 4294901760
    %389 = vmatpush.msra.mxu0 %v388
    %v390 = vand.u32 %v66, 4294901760
    %v391 = vsub.f32 %v66, %v390
    %v392 = vand.u32 %v391, 4294901760
    %393 = vmatpush.msra.mxu0 %v392
    %v394 = vand.u32 %v65, 4294901760
    %v395 = vsub.f32 %v65, %v394
    %v396 = vand.u32 %v395, 4294901760
    %397 = vmatpush.msra.mxu0 %v396
    %v398 = vand.u32 %v64, 4294901760
    %v399 = vsub.f32 %v64, %v398
    %v400 = vand.u32 %v399, 4294901760
    %401 = vmatpush.msra.mxu0 %v400
    %v402 = vand.u32 %v63, 4294901760
    %v403 = vsub.f32 %v63, %v402
    %v404 = vand.u32 %v403, 4294901760
    %405 = vmatpush.msra.mxu0 %v404
    %v406 = vand.u32 %v62, 4294901760
    %v407 = vsub.f32 %v62, %v406
    %v408 = vand.u32 %v407, 4294901760
    %409 = vmatpush.msra.mxu0 %v408
    %v410 = vand.u32 %v61, 4294901760
    %v411 = vsub.f32 %v61, %v410
    %v412 = vand.u32 %v411, 4294901760
    %413 = vmatpush.msra.mxu0 %v412
    %v414 = vand.u32 %v60, 4294901760
    %v415 = vsub.f32 %v60, %v414
    %v416 = vand.u32 %v415, 4294901760
    %417 = vmatpush.msra.mxu0 %v416
    %v418 = vand.u32 %v56, 4294901760
    %419 = vmatmul.f32.gmra.mxu0 %v418
    %v420 = vpop.f32.mrf.mxu0
    %v421 = vadd.f32 %v352, %v420
    %422 = vdwg.mxu0
    %v423 = vand.u32 %v75, 4294901760
    %424 = vmatpush.msra.mxu0 %v423
    %v425 = vand.u32 %v74, 4294901760
    %426 = vmatpush.msra.mxu0 %v425
    %v427 = vand.u32 %v73, 4294901760
    %428 = vmatpush.msra.mxu0 %v427
    %v429 = vand.u32 %v72, 4294901760
    %430 = vmatpush.msra.mxu0 %v429
    %v431 = vand.u32 %v71, 4294901760
    %432 = vmatpush.msra.mxu0 %v431
    %v433 = vand.u32 %v70, 4294901760
    %434 = vmatpush.msra.mxu0 %v433
    %v435 = vand.u32 %v69, 4294901760
    %436 = vmatpush.msra.mxu0 %v435
    %v437 = vand.u32 %v68, 4294901760
    %438 = vmatpush.msra.mxu0 %v437
    %v439 = vand.u32 %v67, 4294901760
    %440 = vmatpush.msra.mxu0 %v439
    %v441 = vand.u32 %v66, 4294901760
    %442 = vmatpush.msra.mxu0 %v441
    %v443 = vand.u32 %v65, 4294901760
    %444 = vmatpush.msra.mxu0 %v443
    %v445 = vand.u32 %v64, 4294901760
    %446 = vmatpush.msra.mxu0 %v445
    %v447 = vand.u32 %v63, 4294901760
    %448 = vmatpush.msra.mxu0 %v447
    %v449 = vand.u32 %v62, 4294901760
    %450 = vmatpush.msra.mxu0 %v449
    %v451 = vand.u32 %v61, 4294901760
    %452 = vmatpush.msra.mxu0 %v451
    %v453 = vand.u32 %v60, 4294901760
    %454 = vmatpush.msra.mxu0 %v453
    %v455 = vand.u32 %v56, 4294901760
    %456 = vmatmul.f32.gmra.mxu0 %v455
    %v457 = vpop.f32.mrf.mxu0
    %v458 = vadd.f32 %v421, %v457
    %459 = vdwg.mxu0
    %v460 = vand.u32 %v91, 4294901760
    %461 = vmatpush.msra.mxu0 %v460
    %v462 = vand.u32 %v90, 4294901760
    %463 = vmatpush.msra.mxu0 %v462
    %v464 = vand.u32 %v89, 4294901760
    %465 = vmatpush.msra.mxu0 %v464
    %v466 = vand.u32 %v88, 4294901760
    %467 = vmatpush.msra.mxu0 %v466
    %v468 = vand.u32 %v87, 4294901760
    %469 = vmatpush.msra.mxu0 %v468
    %v470 = vand.u32 %v86, 4294901760
    %471 = vmatpush.msra.mxu0 %v470
    %v472 = vand.u32 %v85, 4294901760
    %473 = vmatpush.msra.mxu0 %v472
    %v474 = vand.u32 %v84, 4294901760
    %475 = vmatpush.msra.mxu0 %v474
    %v476 = vand.u32 %v83, 4294901760
    %477 = vmatpush.msra.mxu0 %v476
    %v478 = vand.u32 %v82, 4294901760
    %479 = vmatpush.msra.mxu0 %v478
    %v480 = vand.u32 %v81, 4294901760
    %481 = vmatpush.msra.mxu0 %v480
    %v482 = vand.u32 %v80, 4294901760
    %483 = vmatpush.msra.mxu0 %v482
    %v484 = vand.u32 %v79, 4294901760
    %485 = vmatpush.msra.mxu0 %v484
    %v486 = vand.u32 %v78, 4294901760
    %487 = vmatpush.msra.mxu0 %v486
    %v488 = vand.u32 %v77, 4294901760
    %489 = vmatpush.msra.mxu0 %v488
    %v490 = vand.u32 %v76, 4294901760
    %491 = vmatpush.msra.mxu0 %v490
    %v492 = vand.u32 %v57, 4294901760
    %v493 = vsub.f32 %v57, %v492
    %v494 = vand.u32 %v493, 4294901760
    %v495 = vsub.f32 %v493, %v494
    %v496 = vand.u32 %v495, 4294901760
    %497 = vmatmul.f32.gmra.mxu0 %v496
    %v498 = vpop.f32.mrf.mxu0
    %v499 = vadd.f32 %v458, %v498
    %500 = vdwg.mxu0
    %v501 = vand.u32 %v91, 4294901760
    %v502 = vsub.f32 %v91, %v501
    %v503 = vand.u32 %v502, 4294901760
    %v504 = vsub.f32 %v502, %v503
    %v505 = vand.u32 %v504, 4294901760
    %506 = vmatpush.msra.mxu0 %v505
    %v507 = vand.u32 %v90, 4294901760
    %v508 = vsub.f32 %v90, %v507
    %v509 = vand.u32 %v508, 4294901760
    %v510 = vsub.f32 %v508, %v509
    %v511 = vand.u32 %v510, 4294901760
    %512 = vmatpush.msra.mxu0 %v511
    %v513 = vand.u32 %v89, 4294901760
    %v514 = vsub.f32 %v89, %v513
    %v515 = vand.u32 %v514, 4294901760
    %v516 = vsub.f32 %v514, %v515
    %v517 = vand.u32 %v516, 4294901760
    %518 = vmatpush.msra.mxu0 %v517
    %v519 = vand.u32 %v88, 4294901760
    %v520 = vsub.f32 %v88, %v519
    %v521 = vand.u32 %v520, 4294901760
    %v522 = vsub.f32 %v520, %v521
    %v523 = vand.u32 %v522, 4294901760
    %524 = vmatpush.msra.mxu0 %v523
    %v525 = vand.u32 %v87, 4294901760
    %v526 = vsub.f32 %v87, %v525
    %v527 = vand.u32 %v526, 4294901760
    %v528 = vsub.f32 %v526, %v527
    %v529 = vand.u32 %v528, 4294901760
    %530 = vmatpush.msra.mxu0 %v529
    %v531 = vand.u32 %v86, 4294901760
    %v532 = vsub.f32 %v86, %v531
    %v533 = vand.u32 %v532, 4294901760
    %v534 = vsub.f32 %v532, %v533
    %v535 = vand.u32 %v534, 4294901760
    %536 = vmatpush.msra.mxu0 %v535
    %v537 = vand.u32 %v85, 4294901760
    %v538 = vsub.f32 %v85, %v537
    %v539 = vand.u32 %v538, 4294901760
    %v540 = vsub.f32 %v538, %v539
    %v541 = vand.u32 %v540, 4294901760
    %542 = vmatpush.msra.mxu0 %v541
    %v543 = vand.u32 %v84, 4294901760
    %v544 = vsub.f32 %v84, %v543
    %v545 = vand.u32 %v544, 4294901760
    %v546 = vsub.f32 %v544, %v545
    %v547 = vand.u32 %v546, 4294901760
    %548 = vmatpush.msra.mxu0 %v547
    %v549 = vand.u32 %v83, 4294901760
    %v550 = vsub.f32 %v83, %v549
    %v551 = vand.u32 %v550, 4294901760
    %v552 = vsub.f32 %v550, %v551
    %v553 = vand.u32 %v552, 4294901760
    %554 = vmatpush.msra.mxu0 %v553
    %v555 = vand.u32 %v82, 4294901760
    %v556 = vsub.f32 %v82, %v555
    %v557 = vand.u32 %v556, 4294901760
    %v558 = vsub.f32 %v556, %v557
    %v559 = vand.u32 %v558, 4294901760
    %560 = vmatpush.msra.mxu0 %v559
    %v561 = vand.u32 %v81, 4294901760
    %v562 = vsub.f32 %v81, %v561
    %v563 = vand.u32 %v562, 4294901760
    %v564 = vsub.f32 %v562, %v563
    %v565 = vand.u32 %v564, 4294901760
    %566 = vmatpush.msra.mxu0 %v565
    %v567 = vand.u32 %v80, 4294901760
    %v568 = vsub.f32 %v80, %v567
    %v569 = vand.u32 %v568, 4294901760
    %v570 = vsub.f32 %v568, %v569
    %v571 = vand.u32 %v570, 4294901760
    %572 = vmatpush.msra.mxu0 %v571
    %v573 = vand.u32 %v79, 4294901760
    %v574 = vsub.f32 %v79, %v573
    %v575 = vand.u32 %v574, 4294901760
    %v576 = vsub.f32 %v574, %v575
    %v577 = vand.u32 %v576, 4294901760
    %578 = vmatpush.msra.mxu0 %v577
    %v579 = vand.u32 %v78, 4294901760
    %v580 = vsub.f32 %v78, %v579
    %v581 = vand.u32 %v580, 4294901760
    %v582 = vsub.f32 %v580, %v581
    %v583 = vand.u32 %v582, 4294901760
    %584 = vmatpush.msra.mxu0 %v583
    %v585 = vand.u32 %v77, 4294901760
    %v586 = vsub.f32 %v77, %v585
    %v587 = vand.u32 %v586, 4294901760
    %v588 = vsub.f32 %v586, %v587
    %v589 = vand.u32 %v588, 4294901760
    %590 = vmatpush.msra.mxu0 %v589
    %v591 = vand.u32 %v76, 4294901760
    %v592 = vsub.f32 %v76, %v591
    %v593 = vand.u32 %v592, 4294901760
    %v594 = vsub.f32 %v592, %v593
    %v595 = vand.u32 %v594, 4294901760
    %596 = vmatpush.msra.mxu0 %v595
    %v597 = vand.u32 %v57, 4294901760
    %598 = vmatmul.f32.gmra.mxu0 %v597
    %v599 = vpop.f32.mrf.mxu0
    %v600 = vadd.f32 %v499, %v599
    %601 = vdwg.mxu0
    %v602 = vand.u32 %v91, 4294901760
    %v603 = vsub.f32 %v91, %v602
    %604 = vmatpush.msra.mxu0 %v603
    %v605 = vand.u32 %v90, 4294901760
    %v606 = vsub.f32 %v90, %v605
    %607 = vmatpush.msra.mxu0 %v606
    %v608 = vand.u32 %v89, 4294901760
    %v609 = vsub.f32 %v89, %v608
    %610 = vmatpush.msra.mxu0 %v609
    %v611 = vand.u32 %v88, 4294901760
    %v612 = vsub.f32 %v88, %v611
    %613 = vmatpush.msra.mxu0 %v612
    %v614 = vand.u32 %v87, 4294901760
    %v615 = vsub.f32 %v87, %v614
    %616 = vmatpush.msra.mxu0 %v615
    %v617 = vand.u32 %v86, 4294901760
    %v618 = vsub.f32 %v86, %v617
    %619 = vmatpush.msra.mxu0 %v618
    %v620 = vand.u32 %v85, 4294901760
    %v621 = vsub.f32 %v85, %v620
    %622 = vmatpush.msra.mxu0 %v621
    %v623 = vand.u32 %v84, 4294901760
    %v624 = vsub.f32 %v84, %v623
    %625 = vmatpush.msra.mxu0 %v624
    %v626 = vand.u32 %v83, 4294901760
    %v627 = vsub.f32 %v83, %v626
    %628 = vmatpush.msra.mxu0 %v627
    %v629 = vand.u32 %v82, 4294901760
    %v630 = vsub.f32 %v82, %v629
    %631 = vmatpush.msra.mxu0 %v630
    %v632 = vand.u32 %v81, 4294901760
    %v633 = vsub.f32 %v81, %v632
    %634 = vmatpush.msra.mxu0 %v633
    %v635 = vand.u32 %v80, 4294901760
    %v636 = vsub.f32 %v80, %v635
    %637 = vmatpush.msra.mxu0 %v636
    %v638 = vand.u32 %v79, 4294901760
    %v639 = vsub.f32 %v79, %v638
    %640 = vmatpush.msra.mxu0 %v639
    %v641 = vand.u32 %v78, 4294901760
    %v642 = vsub.f32 %v78, %v641
    %643 = vmatpush.msra.mxu0 %v642
    %v644 = vand.u32 %v77, 4294901760
    %v645 = vsub.f32 %v77, %v644
    %646 = vmatpush.msra.mxu0 %v645
    %v647 = vand.u32 %v76, 4294901760
    %v648 = vsub.f32 %v76, %v647
    %649 = vmatpush.msra.mxu0 %v648
    %v650 = vand.u32 %v57, 4294901760
    %v651 = vsub.f32 %v57, %v650
    %652 = vmatmul.f32.gmra.mxu0 %v651
    %v653 = vpop.f32.mrf.mxu0
    %v654 = vadd.f32 %v600, %v653
    %655 = vdwg.mxu0
    %v656 = vand.u32 %v91, 4294901760
    %657 = vmatpush.msra.mxu0 %v656
    %v658 = vand.u32 %v90, 4294901760
    %659 = vmatpush.msra.mxu0 %v658
    %v660 = vand.u32 %v89, 4294901760
    %661 = vmatpush.msra.mxu0 %v660
    %v662 = vand.u32 %v88, 4294901760
    %663 = vmatpush.msra.mxu0 %v662
    %v664 = vand.u32 %v87, 4294901760
    %665 = vmatpush.msra.mxu0 %v664
    %v666 = vand.u32 %v86, 4294901760
    %667 = vmatpush.msra.mxu0 %v666
    %v668 = vand.u32 %v85, 4294901760
    %669 = vmatpush.msra.mxu0 %v668
    %v670 = vand.u32 %v84, 4294901760
    %671 = vmatpush.msra.mxu0 %v670
    %v672 = vand.u32 %v83, 4294901760
    %673 = vmatpush.msra.mxu0 %v672
    %v674 = vand.u32 %v82, 4294901760
    %675 = vmatpush.msra.mxu0 %v674
    %v676 = vand.u32 %v81, 4294901760
    %677 = vmatpush.msra.mxu0 %v676
    %v678 = vand.u32 %v80, 4294901760
    %679 = vmatpush.msra.mxu0 %v678
    %v680 = vand.u32 %v79, 4294901760
    %681 = vmatpush.msra.mxu0 %v680
    %v682 = vand.u32 %v78, 4294901760
    %683 = vmatpush.msra.mxu0 %v682
    %v684 = vand.u32 %v77, 4294901760
    %685 = vmatpush.msra.mxu0 %v684
    %v686 = vand.u32 %v76, 4294901760
    %687 = vmatpush.msra.mxu0 %v686
    %v688 = vand.u32 %v57, 4294901760
    %v689 = vsub.f32 %v57, %v688
    %v690 = vand.u32 %v689, 4294901760
    %691 = vmatmul.f32.gmra.mxu0 %v690
    %v692 = vpop.f32.mrf.mxu0
    %v693 = vadd.f32 %v654, %v692
    %694 = vdwg.mxu0
    %v695 = vand.u32 %v91, 4294901760
    %v696 = vsub.f32 %v91, %v695
    %v697 = vand.u32 %v696, 4294901760
    %698 = vmatpush.msra.mxu0 %v697
    %v699 = vand.u32 %v90, 4294901760
    %v700 = vsub.f32 %v90, %v699
    %v701 = vand.u32 %v700, 4294901760
    %702 = vmatpush.msra.mxu0 %v701
    %v703 = vand.u32 %v89, 4294901760
    %v704 = vsub.f32 %v89, %v703
    %v705 = vand.u32 %v704, 4294901760
    %706 = vmatpush.msra.mxu0 %v705
    %v707 = vand.u32 %v88, 4294901760
    %v708 = vsub.f32 %v88, %v707
    %v709 = vand.u32 %v708, 4294901760
    %710 = vmatpush.msra.mxu0 %v709
    %v711 = vand.u32 %v87, 4294901760
    %v712 = vsub.f32 %v87, %v711
    %v713 = vand.u32 %v712, 4294901760
    %714 = vmatpush.msra.mxu0 %v713
    %v715 = vand.u32 %v86, 4294901760
    %v716 = vsub.f32 %v86, %v715
    %v717 = vand.u32 %v716, 4294901760
    %718 = vmatpush.msra.mxu0 %v717
    %v719 = vand.u32 %v85, 4294901760
    %v720 = vsub.f32 %v85, %v719
    %v721 = vand.u32 %v720, 4294901760
    %722 = vmatpush.msra.mxu0 %v721
    %v723 = vand.u32 %v84, 4294901760
    %v724 = vsub.f32 %v84, %v723
    %v725 = vand.u32 %v724, 4294901760
    %726 = vmatpush.msra.mxu0 %v725
    %v727 = vand.u32 %v83, 4294901760
    %v728 = vsub.f32 %v83, %v727
    %v729 = vand.u32 %v728, 4294901760
    %730 = vmatpush.msra.mxu0 %v729
    %v731 = vand.u32 %v82, 4294901760
    %v732 = vsub.f32 %v82, %v731
    %v733 = vand.u32 %v732, 4294901760
    %734 = vmatpush.msra.mxu0 %v733
    %v735 = vand.u32 %v81, 4294901760
    %v736 = vsub.f32 %v81, %v735
    %v737 = vand.u32 %v736, 4294901760
    %738 = vmatpush.msra.mxu0 %v737
    %v739 = vand.u32 %v80, 4294901760
    %v740 = vsub.f32 %v80, %v739
    %v741 = vand.u32 %v740, 4294901760
    %742 = vmatpush.msra.mxu0 %v741
    %v743 = vand.u32 %v79, 4294901760
    %v744 = vsub.f32 %v79, %v743
    %v745 = vand.u32 %v744, 4294901760
    %746 = vmatpush.msra.mxu0 %v745
    %v747 = vand.u32 %v78, 4294901760
    %v748 = vsub.f32 %v78, %v747
    %v749 = vand.u32 %v748, 4294901760
    %750 = vmatpush.msra.mxu0 %v749
    %v751 = vand.u32 %v77, 4294901760
    %v752 = vsub.f32 %v77, %v751
    %v753 = vand.u32 %v752, 4294901760
    %754 = vmatpush.msra.mxu0 %v753
    %v755 = vand.u32 %v76, 4294901760
    %v756 = vsub.f32 %v76, %v755
    %v757 = vand.u32 %v756, 4294901760
    %758 = vmatpush.msra.mxu0 %v757
    %v759 = vand.u32 %v57, 4294901760
    %760 = vmatmul.f32.gmra.mxu0 %v759
    %v761 = vpop.f32.mrf.mxu0
    %v762 = vadd.f32 %v693, %v761
    %763 = vdwg.mxu0
    %v764 = vand.u32 %v91, 4294901760
    %765 = vmatpush.msra.mxu0 %v764
    %v766 = vand.u32 %v90, 4294901760
    %767 = vmatpush.msra.mxu0 %v766
    %v768 = vand.u32 %v89, 4294901760
    %769 = vmatpush.msra.mxu0 %v768
    %v770 = vand.u32 %v88, 4294901760
    %771 = vmatpush.msra.mxu0 %v770
    %v772 = vand.u32 %v87, 4294901760
    %773 = vmatpush.msra.mxu0 %v772
    %v774 = vand.u32 %v86, 4294901760
    %775 = vmatpush.msra.mxu0 %v774
    %v776 = vand.u32 %v85, 4294901760
    %777 = vmatpush.msra.mxu0 %v776
    %v778 = vand.u32 %v84, 4294901760
    %779 = vmatpush.msra.mxu0 %v778
    %v780 = vand.u32 %v83, 4294901760
    %781 = vmatpush.msra.mxu0 %v780
    %v782 = vand.u32 %v82, 4294901760
    %783 = vmatpush.msra.mxu0 %v782
    %v784 = vand.u32 %v81, 4294901760
    %785 = vmatpush.msra.mxu0 %v784
    %v786 = vand.u32 %v80, 4294901760
    %787 = vmatpush.msra.mxu0 %v786
    %v788 = vand.u32 %v79, 4294901760
    %789 = vmatpush.msra.mxu0 %v788
    %v790 = vand.u32 %v78, 4294901760
    %791 = vmatpush.msra.mxu0 %v790
    %v792 = vand.u32 %v77, 4294901760
    %793 = vmatpush.msra.mxu0 %v792
    %v794 = vand.u32 %v76, 4294901760
    %795 = vmatpush.msra.mxu0 %v794
    %v796 = vand.u32 %v57, 4294901760
    %797 = vmatmul.f32.gmra.mxu0 %v796
    %v798 = vpop.f32.mrf.mxu0
    %v799 = vadd.f32 %v762, %v798
    %800 = vdwg.mxu0
    %v801 = vand.u32 %v107, 4294901760
    %802 = vmatpush.msra.mxu0 %v801
    %v803 = vand.u32 %v106, 4294901760
    %804 = vmatpush.msra.mxu0 %v803
    %v805 = vand.u32 %v105, 4294901760
    %806 = vmatpush.msra.mxu0 %v805
    %v807 = vand.u32 %v104, 4294901760
    %808 = vmatpush.msra.mxu0 %v807
    %v809 = vand.u32 %v103, 4294901760
    %810 = vmatpush.msra.mxu0 %v809
    %v811 = vand.u32 %v102, 4294901760
    %812 = vmatpush.msra.mxu0 %v811
    %v813 = vand.u32 %v101, 4294901760
    %814 = vmatpush.msra.mxu0 %v813
    %v815 = vand.u32 %v100, 4294901760
    %816 = vmatpush.msra.mxu0 %v815
    %v817 = vand.u32 %v99, 4294901760
    %818 = vmatpush.msra.mxu0 %v817
    %v819 = vand.u32 %v98, 4294901760
    %820 = vmatpush.msra.mxu0 %v819
    %v821 = vand.u32 %v97, 4294901760
    %822 = vmatpush.msra.mxu0 %v821
    %v823 = vand.u32 %v96, 4294901760
    %824 = vmatpush.msra.mxu0 %v823
    %v825 = vand.u32 %v95, 4294901760
    %826 = vmatpush.msra.mxu0 %v825
    %v827 = vand.u32 %v94, 4294901760
    %828 = vmatpush.msra.mxu0 %v827
    %v829 = vand.u32 %v93, 4294901760
    %830 = vmatpush.msra.mxu0 %v829
    %v831 = vand.u32 %v92, 4294901760
    %832 = vmatpush.msra.mxu0 %v831
    %v833 = vand.u32 %v58, 4294901760
    %v834 = vsub.f32 %v58, %v833
    %v835 = vand.u32 %v834, 4294901760
    %v836 = vsub.f32 %v834, %v835
    %v837 = vand.u32 %v836, 4294901760
    %838 = vmatmul.f32.gmra.mxu0 %v837
    %v839 = vpop.f32.mrf.mxu0
    %v840 = vadd.f32 %v799, %v839
    %841 = vdwg.mxu0
    %v842 = vand.u32 %v107, 4294901760
    %v843 = vsub.f32 %v107, %v842
    %v844 = vand.u32 %v843, 4294901760
    %v845 = vsub.f32 %v843, %v844
    %v846 = vand.u32 %v845, 4294901760
    %847 = vmatpush.msra.mxu0 %v846
    %v848 = vand.u32 %v106, 4294901760
    %v849 = vsub.f32 %v106, %v848
    %v850 = vand.u32 %v849, 4294901760
    %v851 = vsub.f32 %v849, %v850
    %v852 = vand.u32 %v851, 4294901760
    %853 = vmatpush.msra.mxu0 %v852
    %v854 = vand.u32 %v105, 4294901760
    %v855 = vsub.f32 %v105, %v854
    %v856 = vand.u32 %v855, 4294901760
    %v857 = vsub.f32 %v855, %v856
    %v858 = vand.u32 %v857, 4294901760
    %859 = vmatpush.msra.mxu0 %v858
    %v860 = vand.u32 %v104, 4294901760
    %v861 = vsub.f32 %v104, %v860
    %v862 = vand.u32 %v861, 4294901760
    %v863 = vsub.f32 %v861, %v862
    %v864 = vand.u32 %v863, 4294901760
    %865 = vmatpush.msra.mxu0 %v864
    %v866 = vand.u32 %v103, 4294901760
    %v867 = vsub.f32 %v103, %v866
    %v868 = vand.u32 %v867, 4294901760
    %v869 = vsub.f32 %v867, %v868
    %v870 = vand.u32 %v869, 4294901760
    %871 = vmatpush.msra.mxu0 %v870
    %v872 = vand.u32 %v102, 4294901760
    %v873 = vsub.f32 %v102, %v872
    %v874 = vand.u32 %v873, 4294901760
    %v875 = vsub.f32 %v873, %v874
    %v876 = vand.u32 %v875, 4294901760
    %877 = vmatpush.msra.mxu0 %v876
    %v878 = vand.u32 %v101, 4294901760
    %v879 = vsub.f32 %v101, %v878
    %v880 = vand.u32 %v879, 4294901760
    %v881 = vsub.f32 %v879, %v880
    %v882 = vand.u32 %v881, 4294901760
    %883 = vmatpush.msra.mxu0 %v882
    %v884 = vand.u32 %v100, 4294901760
    %v885 = vsub.f32 %v100, %v884
    %v886 = vand.u32 %v885, 4294901760
    %v887 = vsub.f32 %v885, %v886
    %v888 = vand.u32 %v887, 4294901760
    %889 = vmatpush.msra.mxu0 %v888
    %v890 = vand.u32 %v99, 4294901760
    %v891 = vsub.f32 %v99, %v890
    %v892 = vand.u32 %v891, 4294901760
    %v893 = vsub.f32 %v891, %v892
    %v894 = vand.u32 %v893, 4294901760
    %895 = vmatpush.msra.mxu0 %v894
    %v896 = vand.u32 %v98, 4294901760
    %v897 = vsub.f32 %v98, %v896
    %v898 = vand.u32 %v897, 4294901760
    %v899 = vsub.f32 %v897, %v898
    %v900 = vand.u32 %v899, 4294901760
    %901 = vmatpush.msra.mxu0 %v900
    %v902 = vand.u32 %v97, 4294901760
    %v903 = vsub.f32 %v97, %v902
    %v904 = vand.u32 %v903, 4294901760
    %v905 = vsub.f32 %v903, %v904
    %v906 = vand.u32 %v905, 4294901760
    %907 = vmatpush.msra.mxu0 %v906
    %v908 = vand.u32 %v96, 4294901760
    %v909 = vsub.f32 %v96, %v908
    %v910 = vand.u32 %v909, 4294901760
    %v911 = vsub.f32 %v909, %v910
    %v912 = vand.u32 %v911, 4294901760
    %913 = vmatpush.msra.mxu0 %v912
    %v914 = vand.u32 %v95, 4294901760
    %v915 = vsub.f32 %v95, %v914
    %v916 = vand.u32 %v915, 4294901760
    %v917 = vsub.f32 %v915, %v916
    %v918 = vand.u32 %v917, 4294901760
    %919 = vmatpush.msra.mxu0 %v918
    %v920 = vand.u32 %v94, 4294901760
    %v921 = vsub.f32 %v94, %v920
    %v922 = vand.u32 %v921, 4294901760
    %v923 = vsub.f32 %v921, %v922
    %v924 = vand.u32 %v923, 4294901760
    %925 = vmatpush.msra.mxu0 %v924
    %v926 = vand.u32 %v93, 4294901760
    %v927 = vsub.f32 %v93, %v926
    %v928 = vand.u32 %v927, 4294901760
    %v929 = vsub.f32 %v927, %v928
    %v930 = vand.u32 %v929, 4294901760
    %931 = vmatpush.msra.mxu0 %v930
    %v932 = vand.u32 %v92, 4294901760
    %v933 = vsub.f32 %v92, %v932
    %v934 = vand.u32 %v933, 4294901760
    %v935 = vsub.f32 %v933, %v934
    %v936 = vand.u32 %v935, 4294901760
    %937 = vmatpush.msra.mxu0 %v936
    %v938 = vand.u32 %v58, 4294901760
    %939 = vmatmul.f32.gmra.mxu0 %v938
    %v940 = vpop.f32.mrf.mxu0
    %v941 = vadd.f32 %v840, %v940
    %942 = vdwg.mxu0
    %v943 = vand.u32 %v107, 4294901760
    %v944 = vsub.f32 %v107, %v943
    %945 = vmatpush.msra.mxu0 %v944
    %v946 = vand.u32 %v106, 4294901760
    %v947 = vsub.f32 %v106, %v946
    %948 = vmatpush.msra.mxu0 %v947
    %v949 = vand.u32 %v105, 4294901760
    %v950 = vsub.f32 %v105, %v949
    %951 = vmatpush.msra.mxu0 %v950
    %v952 = vand.u32 %v104, 4294901760
    %v953 = vsub.f32 %v104, %v952
    %954 = vmatpush.msra.mxu0 %v953
    %v955 = vand.u32 %v103, 4294901760
    %v956 = vsub.f32 %v103, %v955
    %957 = vmatpush.msra.mxu0 %v956
    %v958 = vand.u32 %v102, 4294901760
    %v959 = vsub.f32 %v102, %v958
    %960 = vmatpush.msra.mxu0 %v959
    %v961 = vand.u32 %v101, 4294901760
    %v962 = vsub.f32 %v101, %v961
    %963 = vmatpush.msra.mxu0 %v962
    %v964 = vand.u32 %v100, 4294901760
    %v965 = vsub.f32 %v100, %v964
    %966 = vmatpush.msra.mxu0 %v965
    %v967 = vand.u32 %v99, 4294901760
    %v968 = vsub.f32 %v99, %v967
    %969 = vmatpush.msra.mxu0 %v968
    %v970 = vand.u32 %v98, 4294901760
    %v971 = vsub.f32 %v98, %v970
    %972 = vmatpush.msra.mxu0 %v971
    %v973 = vand.u32 %v97, 4294901760
    %v974 = vsub.f32 %v97, %v973
    %975 = vmatpush.msra.mxu0 %v974
    %v976 = vand.u32 %v96, 4294901760
    %v977 = vsub.f32 %v96, %v976
    %978 = vmatpush.msra.mxu0 %v977
    %v979 = vand.u32 %v95, 4294901760
    %v980 = vsub.f32 %v95, %v979
    %981 = vmatpush.msra.mxu0 %v980
    %v982 = vand.u32 %v94, 4294901760
    %v983 = vsub.f32 %v94, %v982
    %984 = vmatpush.msra.mxu0 %v983
    %v985 = vand.u32 %v93, 4294901760
    %v986 = vsub.f32 %v93, %v985
    %987 = vmatpush.msra.mxu0 %v986
    %v988 = vand.u32 %v92, 4294901760
    %v989 = vsub.f32 %v92, %v988
    %990 = vmatpush.msra.mxu0 %v989
    %v991 = vand.u32 %v58, 4294901760
    %v992 = vsub.f32 %v58, %v991
    %993 = vmatmul.f32.gmra.mxu0 %v992
    %v994 = vpop.f32.mrf.mxu0
    %v995 = vadd.f32 %v941, %v994
    %996 = vdwg.mxu0
    %v997 = vand.u32 %v107, 4294901760
    %998 = vmatpush.msra.mxu0 %v997
    %v999 = vand.u32 %v106, 4294901760
    %1000 = vmatpush.msra.mxu0 %v999
    %v1001 = vand.u32 %v105, 4294901760
    %1002 = vmatpush.msra.mxu0 %v1001
    %v1003 = vand.u32 %v104, 4294901760
    %1004 = vmatpush.msra.mxu0 %v1003
    %v1005 = vand.u32 %v103, 4294901760
    %1006 = vmatpush.msra.mxu0 %v1005
    %v1007 = vand.u32 %v102, 4294901760
    %1008 = vmatpush.msra.mxu0 %v1007
    %v1009 = vand.u32 %v101, 4294901760
    %1010 = vmatpush.msra.mxu0 %v1009
    %v1011 = vand.u32 %v100, 4294901760
    %1012 = vmatpush.msra.mxu0 %v1011
    %v1013 = vand.u32 %v99, 4294901760
    %1014 = vmatpush.msra.mxu0 %v1013
    %v1015 = vand.u32 %v98, 4294901760
    %1016 = vmatpush.msra.mxu0 %v1015
    %v1017 = vand.u32 %v97, 4294901760
    %1018 = vmatpush.msra.mxu0 %v1017
    %v1019 = vand.u32 %v96, 4294901760
    %1020 = vmatpush.msra.mxu0 %v1019
    %v1021 = vand.u32 %v95, 4294901760
    %1022 = vmatpush.msra.mxu0 %v1021
    %v1023 = vand.u32 %v94, 4294901760
    %1024 = vmatpush.msra.mxu0 %v1023
    %v1025 = vand.u32 %v93, 4294901760
    %1026 = vmatpush.msra.mxu0 %v1025
    %v1027 = vand.u32 %v92, 4294901760
    %1028 = vmatpush.msra.mxu0 %v1027
    %v1029 = vand.u32 %v58, 4294901760
    %v1030 = vsub.f32 %v58, %v1029
    %v1031 = vand.u32 %v1030, 4294901760
    %1032 = vmatmul.f32.gmra.mxu0 %v1031
    %v1033 = vpop.f32.mrf.mxu0
    %v1034 = vadd.f32 %v995, %v1033
    %1035 = vdwg.mxu0
    %v1036 = vand.u32 %v107, 4294901760
    %v1037 = vsub.f32 %v107, %v1036
    %v1038 = vand.u32 %v1037, 4294901760
    %1039 = vmatpush.msra.mxu0 %v1038
    %v1040 = vand.u32 %v106, 4294901760
    %v1041 = vsub.f32 %v106, %v1040
    %v1042 = vand.u32 %v1041, 4294901760
    %1043 = vmatpush.msra.mxu0 %v1042
    %v1044 = vand.u32 %v105, 4294901760
    %v1045 = vsub.f32 %v105, %v1044
    %v1046 = vand.u32 %v1045, 4294901760
    %1047 = vmatpush.msra.mxu0 %v1046
    %v1048 = vand.u32 %v104, 4294901760
    %v1049 = vsub.f32 %v104, %v1048
    %v1050 = vand.u32 %v1049, 4294901760
    %1051 = vmatpush.msra.mxu0 %v1050
    %v1052 = vand.u32 %v103, 4294901760
    %v1053 = vsub.f32 %v103, %v1052
    %v1054 = vand.u32 %v1053, 4294901760
    %1055 = vmatpush.msra.mxu0 %v1054
    %v1056 = vand.u32 %v102, 4294901760
    %v1057 = vsub.f32 %v102, %v1056
    %v1058 = vand.u32 %v1057, 4294901760
    %1059 = vmatpush.msra.mxu0 %v1058
    %v1060 = vand.u32 %v101, 4294901760
    %v1061 = vsub.f32 %v101, %v1060
    %v1062 = vand.u32 %v1061, 4294901760
    %1063 = vmatpush.msra.mxu0 %v1062
    %v1064 = vand.u32 %v100, 4294901760
    %v1065 = vsub.f32 %v100, %v1064
    %v1066 = vand.u32 %v1065, 4294901760
    %1067 = vmatpush.msra.mxu0 %v1066
    %v1068 = vand.u32 %v99, 4294901760
    %v1069 = vsub.f32 %v99, %v1068
    %v1070 = vand.u32 %v1069, 4294901760
    %1071 = vmatpush.msra.mxu0 %v1070
    %v1072 = vand.u32 %v98, 4294901760
    %v1073 = vsub.f32 %v98, %v1072
    %v1074 = vand.u32 %v1073, 4294901760
    %1075 = vmatpush.msra.mxu0 %v1074
    %v1076 = vand.u32 %v97, 4294901760
    %v1077 = vsub.f32 %v97, %v1076
    %v1078 = vand.u32 %v1077, 4294901760
    %1079 = vmatpush.msra.mxu0 %v1078
    %v1080 = vand.u32 %v96, 4294901760
    %v1081 = vsub.f32 %v96, %v1080
    %v1082 = vand.u32 %v1081, 4294901760
    %1083 = vmatpush.msra.mxu0 %v1082
    %v1084 = vand.u32 %v95, 4294901760
    %v1085 = vsub.f32 %v95, %v1084
    %v1086 = vand.u32 %v1085, 4294901760
    %1087 = vmatpush.msra.mxu0 %v1086
    %v1088 = vand.u32 %v94, 4294901760
    %v1089 = vsub.f32 %v94, %v1088
    %v1090 = vand.u32 %v1089, 4294901760
    %1091 = vmatpush.msra.mxu0 %v1090
    %v1092 = vand.u32 %v93, 4294901760
    %v1093 = vsub.f32 %v93, %v1092
    %v1094 = vand.u32 %v1093, 4294901760
    %1095 = vmatpush.msra.mxu0 %v1094
    %v1096 = vand.u32 %v92, 4294901760
    %v1097 = vsub.f32 %v92, %v1096
    %v1098 = vand.u32 %v1097, 4294901760
    %1099 = vmatpush.msra.mxu0 %v1098
    %v1100 = vand.u32 %v58, 4294901760
    %1101 = vmatmul.f32.gmra.mxu0 %v1100
    %v1102 = vpop.f32.mrf.mxu0
    %v1103 = vadd.f32 %v1034, %v1102
    %1104 = vdwg.mxu0
    %v1105 = vand.u32 %v107, 4294901760
    %1106 = vmatpush.msra.mxu0 %v1105
    %v1107 = vand.u32 %v106, 4294901760
    %1108 = vmatpush.msra.mxu0 %v1107
    %v1109 = vand.u32 %v105, 4294901760
    %1110 = vmatpush.msra.mxu0 %v1109
    %v1111 = vand.u32 %v104, 4294901760
    %1112 = vmatpush.msra.mxu0 %v1111
    %v1113 = vand.u32 %v103, 4294901760
    %1114 = vmatpush.msra.mxu0 %v1113
    %v1115 = vand.u32 %v102, 4294901760
    %1116 = vmatpush.msra.mxu0 %v1115
    %v1117 = vand.u32 %v101, 4294901760
    %1118 = vmatpush.msra.mxu0 %v1117
    %v1119 = vand.u32 %v100, 4294901760
    %1120 = vmatpush.msra.mxu0 %v1119
    %v1121 = vand.u32 %v99, 4294901760
    %1122 = vmatpush.msra.mxu0 %v1121
    %v1123 = vand.u32 %v98, 4294901760
    %1124 = vmatpush.msra.mxu0 %v1123
    %v1125 = vand.u32 %v97, 4294901760
    %1126 = vmatpush.msra.mxu0 %v1125
    %v1127 = vand.u32 %v96, 4294901760
    %1128 = vmatpush.msra.mxu0 %v1127
    %v1129 = vand.u32 %v95, 4294901760
    %1130 = vmatpush.msra.mxu0 %v1129
    %v1131 = vand.u32 %v94, 4294901760
    %1132 = vmatpush.msra.mxu0 %v1131
    %v1133 = vand.u32 %v93, 4294901760
    %1134 = vmatpush.msra.mxu0 %v1133
    %v1135 = vand.u32 %v92, 4294901760
    %1136 = vmatpush.msra.mxu0 %v1135
    %v1137 = vand.u32 %v58, 4294901760
    %1138 = vmatmul.f32.gmra.mxu0 %v1137
    %v1139 = vpop.f32.mrf.mxu0
    %v1140 = vadd.f32 %v1103, %v1139
    %1141 = vdwg.mxu0
    %1142 = vmatpush.msra.mxu0 0.0
    %1143 = vmatpush.msra.mxu0 0.0
    %1144 = vmatpush.msra.mxu0 0.0
    %1145 = vmatpush.msra.mxu0 0.0
    %1146 = vmatpush.msra.mxu0 0.0
    %1147 = vmatpush.msra.mxu0 0.0
    %1148 = vmatpush.msra.mxu0 0.0
    %1149 = vmatpush.msra.mxu0 0.0
    %1150 = vmatpush.msra.mxu0 0.0
    %1151 = vmatpush.msra.mxu0 0.0
    %1152 = vmatpush.msra.mxu0 0.0
    %1153 = vmatpush.msra.mxu0 0.0
    %1154 = vmatpush.msra.mxu0 0.0
    %v1155 = vand.u32 %v117, 4294901760
    %1156 = vmatpush.msra.mxu0 %v1155
    %v1157 = vand.u32 %v109, 4294901760
    %1158 = vmatpush.msra.mxu0 %v1157
    %v1159 = vand.u32 %v108, 4294901760
    %1160 = vmatpush.msra.mxu0 %v1159
    %v1161 = vand.u32 %v113, 4294901760
    %v1162 = vsub.f32 %v113, %v1161
    %v1163 = vand.u32 %v1162, 4294901760
    %v1164 = vsub.f32 %v1162, %v1163
    %v1165 = vand.u32 %v1164, 4294901760
    %1166 = vmatmul.f32.gmra.mxu0 %v1165
    %v1167 = vpop.f32.mrf.mxu0
    %v1168 = vadd.f32 %v1140, %v1167
    %1169 = vdwg.mxu0
    %1170 = vmatpush.msra.mxu0 0.0
    %1171 = vmatpush.msra.mxu0 0.0
    %1172 = vmatpush.msra.mxu0 0.0
    %1173 = vmatpush.msra.mxu0 0.0
    %1174 = vmatpush.msra.mxu0 0.0
    %1175 = vmatpush.msra.mxu0 0.0
    %1176 = vmatpush.msra.mxu0 0.0
    %1177 = vmatpush.msra.mxu0 0.0
    %1178 = vmatpush.msra.mxu0 0.0
    %1179 = vmatpush.msra.mxu0 0.0
    %1180 = vmatpush.msra.mxu0 0.0
    %1181 = vmatpush.msra.mxu0 0.0
    %1182 = vmatpush.msra.mxu0 0.0
    %v1183 = vand.u32 %v117, 4294901760
    %v1184 = vsub.f32 %v117, %v1183
    %v1185 = vand.u32 %v1184, 4294901760
    %v1186 = vsub.f32 %v1184, %v1185
    %v1187 = vand.u32 %v1186, 4294901760
    %1188 = vmatpush.msra.mxu0 %v1187
    %v1189 = vand.u32 %v109, 4294901760
    %v1190 = vsub.f32 %v109, %v1189
    %v1191 = vand.u32 %v1190, 4294901760
    %v1192 = vsub.f32 %v1190, %v1191
    %v1193 = vand.u32 %v1192, 4294901760
    %1194 = vmatpush.msra.mxu0 %v1193
    %v1195 = vand.u32 %v108, 4294901760
    %v1196 = vsub.f32 %v108, %v1195
    %v1197 = vand.u32 %v1196, 4294901760
    %v1198 = vsub.f32 %v1196, %v1197
    %v1199 = vand.u32 %v1198, 4294901760
    %1200 = vmatpush.msra.mxu0 %v1199
    %v1201 = vand.u32 %v113, 4294901760
    %1202 = vmatmul.f32.gmra.mxu0 %v1201
    %v1203 = vpop.f32.mrf.mxu0
    %v1204 = vadd.f32 %v1168, %v1203
    %1205 = vdwg.mxu0
    %1206 = vmatpush.msra.mxu0 0.0
    %1207 = vmatpush.msra.mxu0 0.0
    %1208 = vmatpush.msra.mxu0 0.0
    %1209 = vmatpush.msra.mxu0 0.0
    %1210 = vmatpush.msra.mxu0 0.0
    %1211 = vmatpush.msra.mxu0 0.0
    %1212 = vmatpush.msra.mxu0 0.0
    %1213 = vmatpush.msra.mxu0 0.0
    %1214 = vmatpush.msra.mxu0 0.0
    %1215 = vmatpush.msra.mxu0 0.0
    %1216 = vmatpush.msra.mxu0 0.0
    %1217 = vmatpush.msra.mxu0 0.0
    %1218 = vmatpush.msra.mxu0 0.0
    %v1219 = vand.u32 %v117, 4294901760
    %v1220 = vsub.f32 %v117, %v1219
    %1221 = vmatpush.msra.mxu0 %v1220
    %v1222 = vand.u32 %v109, 4294901760
    %v1223 = vsub.f32 %v109, %v1222
    %1224 = vmatpush.msra.mxu0 %v1223
    %v1225 = vand.u32 %v108, 4294901760
    %v1226 = vsub.f32 %v108, %v1225
    %1227 = vmatpush.msra.mxu0 %v1226
    %v1228 = vand.u32 %v113, 4294901760
    %v1229 = vsub.f32 %v113, %v1228
    %1230 = vmatmul.f32.gmra.mxu0 %v1229
    %v1231 = vpop.f32.mrf.mxu0
    %v1232 = vadd.f32 %v1204, %v1231
    %1233 = vdwg.mxu0
    %1234 = vmatpush.msra.mxu0 0.0
    %1235 = vmatpush.msra.mxu0 0.0
    %1236 = vmatpush.msra.mxu0 0.0
    %1237 = vmatpush.msra.mxu0 0.0
    %1238 = vmatpush.msra.mxu0 0.0
    %1239 = vmatpush.msra.mxu0 0.0
    %1240 = vmatpush.msra.mxu0 0.0
    %1241 = vmatpush.msra.mxu0 0.0
    %1242 = vmatpush.msra.mxu0 0.0
    %1243 = vmatpush.msra.mxu0 0.0
    %1244 = vmatpush.msra.mxu0 0.0
    %1245 = vmatpush.msra.mxu0 0.0
    %1246 = vmatpush.msra.mxu0 0.0
    %v1247 = vand.u32 %v117, 4294901760
    %1248 = vmatpush.msra.mxu0 %v1247
    %v1249 = vand.u32 %v109, 4294901760
    %1250 = vmatpush.msra.mxu0 %v1249
    %v1251 = vand.u32 %v108, 4294901760
    %1252 = vmatpush.msra.mxu0 %v1251
    %v1253 = vand.u32 %v113, 4294901760
    %v1254 = vsub.f32 %v113, %v1253
    %v1255 = vand.u32 %v1254, 4294901760
    %1256 = vmatmul.f32.gmra.mxu0 %v1255
    %v1257 = vpop.f32.mrf.mxu0
    %v1258 = vadd.f32 %v1232, %v1257
    %1259 = vdwg.mxu0
    %1260 = vmatpush.msra.mxu0 0.0
    %1261 = vmatpush.msra.mxu0 0.0
    %1262 = vmatpush.msra.mxu0 0.0
    %1263 = vmatpush.msra.mxu0 0.0
    %1264 = vmatpush.msra.mxu0 0.0
    %1265 = vmatpush.msra.mxu0 0.0
    %1266 = vmatpush.msra.mxu0 0.0
    %1267 = vmatpush.msra.mxu0 0.0
    %1268 = vmatpush.msra.mxu0 0.0
    %1269 = vmatpush.msra.mxu0 0.0
    %1270 = vmatpush.msra.mxu0 0.0
    %1271 = vmatpush.msra.mxu0 0.0
    %1272 = vmatpush.msra.mxu0 0.0
    %v1273 = vand.u32 %v117, 4294901760
    %v1274 = vsub.f32 %v117, %v1273
    %v1275 = vand.u32 %v1274, 4294901760
    %1276 = vmatpush.msra.mxu0 %v1275
    %v1277 = vand.u32 %v109, 4294901760
    %v1278 = vsub.f32 %v109, %v1277
    %v1279 = vand.u32 %v1278, 4294901760
    %1280 = vmatpush.msra.mxu0 %v1279
    %v1281 = vand.u32 %v108, 4294901760
    %v1282 = vsub.f32 %v108, %v1281
    %v1283 = vand.u32 %v1282, 4294901760
    %1284 = vmatpush.msra.mxu0 %v1283
    %v1285 = vand.u32 %v113, 4294901760
    %1286 = vmatmul.f32.gmra.mxu0 %v1285
    %v1287 = vpop.f32.mrf.mxu0
    %v1288 = vadd.f32 %v1258, %v1287
    %1289 = vdwg.mxu0
    %1290 = vmatpush.msra.mxu0 0.0
    %1291 = vmatpush.msra.mxu0 0.0
    %1292 = vmatpush.msra.mxu0 0.0
    %1293 = vmatpush.msra.mxu0 0.0
    %1294 = vmatpush.msra.mxu0 0.0
    %1295 = vmatpush.msra.mxu0 0.0
    %1296 = vmatpush.msra.mxu0 0.0
    %1297 = vmatpush.msra.mxu0 0.0
    %1298 = vmatpush.msra.mxu0 0.0
    %1299 = vmatpush.msra.mxu0 0.0
    %1300 = vmatpush.msra.mxu0 0.0
    %1301 = vmatpush.msra.mxu0 0.0
    %1302 = vmatpush.msra.mxu0 0.0
    %v1303 = vand.u32 %v117, 4294901760
    %1304 = vmatpush.msra.mxu0 %v1303
    %v1305 = vand.u32 %v109, 4294901760
    %1306 = vmatpush.msra.mxu0 %v1305
    %v1307 = vand.u32 %v108, 4294901760
    %1308 = vmatpush.msra.mxu0 %v1307
    %v1309 = vand.u32 %v113, 4294901760
    %1310 = vmatmul.f32.gmra.mxu0 %v1309
    %v1311 = vpop.f32.mrf.mxu0
    %v1312 = vadd.f32 %v1288, %v1311
    %1313 = vdwg.mxu0
    %v1314 = vmax.f32 %v1312, 0.0
    %v1315 = vld [vmem:[%s2] sm:$0x1]
    %v1317 = vperm.slane %v1315, 0
    %v1319 = vmul.f32 %v1314, %v1317
    %1320 = vadd.xlane.f32.xlu0 %v1319
    %v1321 = vpop.xlane.xlu0 %1320
    %s1322 = sld [smem:[#allocation2]]
    %v1323 = vstv %s1322
    %v1324 = vadd.f32 %v1321, %v1323
    %v1325 = vand.u32 2147483647, %v1324
    %v1326 = vsub.f32 0.0, %v1325
    %v1327 = vmul.f32 %v1326, 1.442695
    %v1328 = vpow.pop %v1327
    %vm1329 = vcmp.ge.f32.partialorder %v1324, 0.0
    %v1330 = vsel %vm1329, 1.0, %v1328
    %v1331 = vadd.f32 %v1328, 1.0
    %v1332 = vrcp.pop %v1331
    %v1333 = vmul.f32 %v1331, %v1332
    %v1334 = vsub.f32 1.0, %v1333
    %v1335 = vmul.f32 %v1332, %v1334
    %v1336 = vadd.f32 %v1332, %v1335
    %vm1337 = vweird.f32 %v1331
    %vm1338 = vweird.f32 %v1332
    %vm1339 = vmor %vm1337, %vm1338
    %v1340 = vsel %vm1339, %v1332, %v1336
    %v1341 = vand.u32 2147483647, %v1331
    %vm1342 = vcmp.eq.f32.partialorder %v1341, 8.507059e+37
    %v1343 = vand.u32 %v1331, 2147483648
    %v1344 = vor.u32 1.1754944e-38, %v1343
    %v1345 = vsel %vm1342, %v1344, %v1340
    %v1346 = vmul.f32 %v1330, %v1345
    %s1347 = sld [smem:[#allocation3]]
    %v1348 = vstv %s1347
    %v1349 = vmul.f32 %v1346, %v1348
    %s1350 = sld [smem:[#allocation4]]
    %v1351 = vstv %s1350
    %v1352 = vadd.f32 %v1349, %v1351
    %vm1353 = vcmask 7168
    %1354 = vst.msk [vmem:[%s6] sm:$0xff] %vm1353, %v1352
    // Predicated region
    $region34: #{tpu_custom_call.1} parent=1 // pred_check
      _
    $region35: #{tpu_custom_call.1} parent=1 // pred_check_branch
      %1356 = sbr.rel (0) target = $region37
    $region36: #{tpu_custom_call.1} parent=1 // pred_region
      _
    $region37: #{tpu_custom_call.1} parent=1 // pred_fallthru
      _
    // Predicated region
    $region38: #{tpu_custom_call.1} parent=1 // pred_check
      _
    $region39: #{tpu_custom_call.1} parent=1 // pred_check_branch
      %1358 = sbr.rel (0) target = $region41
    $region40: #{tpu_custom_call.1} parent=1 // pred_region
      _
    $region41: #{tpu_custom_call.1} parent=1 // pred_fallthru
      _
    %1359 = vsyncpa [#allocation6], 1
    %1360 = vsyncpa [#allocation8], 1

</llo_original>
